<compile_context>
chip_gen: v5e
topology: v5e:2x2
jax: 0.10.0
libtpu: 0.0.40
codegen_flags: <defaults>
</compile_context>

<pallas_src>
import functools

import jax
import jax.numpy as jnp
from jax.experimental import pallas as pl
from jax.experimental.pallas import tpu as pltpu


# ----------------------------- kernels ------------------------------------ #

def revin_norm_kernel(x_ref, w_ref, b_ref, y_ref, stats_ref,
                      *, eps: float, affine: bool, k: int, C: int, T: int):
    # x_ref: (Bb, Tp, kC) block covering Bb batch instances (Tp = T // k).
    x = x_ref[...].astype(jnp.float32)                       # (Bb, Tp, kC)
    kC = k * C
    inv_T = 1.0 / T

    if k > 1:
        # Iota-built selection matrices (avoid minor-dim reshapes in-kernel):
        #   fold_m (kC, C): sums the k packed time-groups per channel.
        #   tile_m (C, kC): tiles per-channel values back to lane width kC.
        r = jax.lax.broadcasted_iota(jnp.int32, (kC, C), 0)
        c = jax.lax.broadcasted_iota(jnp.int32, (kC, C), 1)
        fold_m = (r % C == c).astype(jnp.float32)
        r2 = jax.lax.broadcasted_iota(jnp.int32, (C, kC), 0)
        c2 = jax.lax.broadcasted_iota(jnp.int32, (C, kC), 1)
        tile_m = (c2 % C == r2).astype(jnp.float32)
        fold = lambda v: jnp.dot(v, fold_m, preferred_element_type=jnp.float32)
        tile = lambda v: jnp.dot(v, tile_m, preferred_element_type=jnp.float32)
    else:
        fold = lambda v: v
        tile = lambda v: v

    # Per-(batch, channel) mean / biased variance over all T time steps.
    mean_c = fold(jnp.sum(x, axis=1)) * inv_T                # (Bb, C)
    xm = x - tile(mean_c)[:, None, :]                        # (Bb, Tp, kC)
    var_c = fold(jnp.sum(xm * xm, axis=1)) * inv_T           # (Bb, C)

    # Stored stdev uses a full-precision sqrt; normalization uses a
    # per-channel rsqrt + broadcast multiply (no T*C-element divide).
    std_c = jnp.sqrt(var_c + eps)                            # (Bb, C)
    rstd_c = jax.lax.rsqrt(var_c + eps)                      # (Bb, C)

    y = xm * tile(rstd_c)[:, None, :]
    if affine:
        w = w_ref[...].astype(jnp.float32)                   # (1, kC) pre-tiled
        b = b_ref[...].astype(jnp.float32)                   # (1, kC) pre-tiled
        y = y * w[:, None, :] + b[:, None, :]

    y_ref[...] = y.astype(y_ref.dtype)
    # Merge mean + stdev into one (Bb, 2, C) store (single stats DMA / step).
    stats = jnp.concatenate([mean_c[:, None, :], std_c[:, None, :]], axis=1)
    stats_ref[...] = stats.astype(stats_ref.dtype)


def revin_denorm_kernel(x_ref, mean_ref, std_ref, w_ref, b_ref, y_ref,
                        *, eps: float, affine: bool):
    x = x_ref[...].astype(jnp.float32)                       # (Bb, Tp, kC)
    mean = mean_ref[...].astype(jnp.float32)                 # (Bb, 1, kC)
    std = std_ref[...].astype(jnp.float32)                   # (Bb, 1, kC)

    if affine:
        w = w_ref[...].astype(jnp.float32)                   # (1, kC)
        b = b_ref[...].astype(jnp.float32)                   # (1, kC)
        # Per-channel reciprocal (O(kC), EUP) instead of a T*C-element divide.
        inv_w = pl.reciprocal(w + eps * eps, approx=False)
        x = (x - b[:, None, :]) * inv_w[:, None, :]

    y = x * std + mean
    y_ref[...] = y.astype(y_ref.dtype)


# --------------------------- tiling helpers -------------------------------- #

def _pack_factor(T: int, C: int) -> int:
    """Lane-packing factor k: reshape (B,T,C) -> (B,T//k,k*C), k*C % 128 == 0."""
    if C >= 128:
        return 1
    if 128 % C == 0:
        base = 128 // C
        for m in (4, 3, 2, 1):          # prefer wider lane dims (up to 512)
            k = base * m
            if T % k == 0:
                return k
    return 1


def _pick_batch_block(B: int, Tp: int, kC: int, target_bytes: int = 2 << 20) -> int:
    """Batch-block rows whose (Bb, Tp, kC) f32 block is ~<= 2 MiB.

    2 MiB blocks keep double-buffered in+out plus ~3 block-sized f32
    temporaries comfortably under v7x's 64 MiB VMEM (and v5e/v6e scoped
    limits once raised) while sitting in the 85%+ HBM-roofline regime.
    The grid uses cdiv + a masked partial last block, so Bb need not divide B.
    """
    per_instance = max(1, Tp * kC * 4)
    bb = max(1, min(B, target_bytes // per_instance))
    # Keep the single "parallel" grid axis >= 2 steps when possible so both
    # v7x TensorCores get work (no effect on v5e/v6e correctness or perf).
    if B >= 2 and bb >= B:
        bb = (B + 1) // 2
    return int(bb)


_VMEM_LIMIT = 48 * 1024 * 1024   # safe on v5e/v6e (128 MiB) and v7x (64 MiB)


# ----------------------------- wrappers ------------------------------------ #

def revin_norm(x, weight, bias, *, eps: float, affine: bool):
    """Returns (normalized_x, mean, stdev). x: (B, T, C)."""
    B, T, C = x.shape
    k = _pack_factor(T, C)
    Tp, kC = T // k, k * C

    xp = x.reshape(B, Tp, kC)                         # metadata-only reshape
    w_p = jnp.tile(weight.reshape(1, C).astype(jnp.float32), (1, k))  # (1, kC)
    b_p = jnp.tile(bias.reshape(1, C).astype(jnp.float32), (1, k))    # (1, kC)

    Bb = _pick_batch_block(B, Tp, kC)
    grid = (pl.cdiv(B, Bb),)
    kernel = functools.partial(revin_norm_kernel, eps=eps, affine=affine,
                               k=k, C=C, T=T)
    itemsize = int(jnp.dtype(x.dtype).itemsize)
    cost = pl.CostEstimate(
        flops=int(8 * B * T * C),
        transcendentals=int(2 * B * C),
        bytes_accessed=int(2 * B * T * C * itemsize + 2 * B * C * 4 + 2 * kC * 4),
    )

    y, stats = pl.pallas_call(
        kernel,
        out_shape=(
            jax.ShapeDtypeStruct((B, Tp, kC), x.dtype),
            jax.ShapeDtypeStruct((B, 2, C), jnp.float32),
        ),
        grid_spec=pltpu.PrefetchScalarGridSpec(
            num_scalar_prefetch=0,
            grid=grid,
            in_specs=[
                pl.BlockSpec((Bb, Tp, kC), lambda i: (i, 0, 0)),   # x (packed)
                pl.BlockSpec((1, kC), lambda i: (0, 0)),           # weight
                pl.BlockSpec((1, kC), lambda i: (0, 0)),           # bias
            ],
            out_specs=[
                pl.BlockSpec((Bb, Tp, kC), lambda i: (i, 0, 0)),   # y (packed)
                pl.BlockSpec((Bb, 2, C), lambda i: (i, 0, 0)),     # mean|stdev
            ],
        ),
        compiler_params=pltpu.CompilerParams(
            dimension_semantics=("parallel",),
            vmem_limit_bytes=_VMEM_LIMIT),
        cost_estimate=cost,
    )(xp, w_p, b_p)

    y = y.reshape(B, T, C)
    mean = stats[:, 0:1, :]
    std = stats[:, 1:2, :]
    return y, mean, std


def revin_denorm(x, mean, std, weight, bias, *, eps: float, affine: bool):
    """Inverse transform. x: (B, T, C); mean/std: (B, 1, C)."""
    B, T, C = x.shape
    k = _pack_factor(T, C)
    Tp, kC = T // k, k * C

    xp = x.reshape(B, Tp, kC)                         # metadata-only reshape
    mean_p = jnp.tile(mean.astype(jnp.float32), (1, 1, k))   # (B, 1, kC)
    std_p = jnp.tile(std.astype(jnp.float32), (1, 1, k))     # (B, 1, kC)
    w_p = jnp.tile(weight.reshape(1, C).astype(jnp.float32), (1, k))
    b_p = jnp.tile(bias.reshape(1, C).astype(jnp.float32), (1, k))

    Bb = _pick_batch_block(B, Tp, kC)
    grid = (pl.cdiv(B, Bb),)
    kernel = functools.partial(revin_denorm_kernel, eps=eps, affine=affine)
    itemsize = int(jnp.dtype(x.dtype).itemsize)
    cost = pl.CostEstimate(
        flops=int(4 * B * T * C),
        transcendentals=int(kC),
        bytes_accessed=int(2 * B * T * C * itemsize + 2 * B * kC * 4 + 2 * kC * 4),
    )

    y = pl.pallas_call(
        kernel,
        out_shape=jax.ShapeDtypeStruct((B, Tp, kC), x.dtype),
        grid_spec=pltpu.PrefetchScalarGridSpec(
            num_scalar_prefetch=0,
            grid=grid,
            in_specs=[
                pl.BlockSpec((Bb, Tp, kC), lambda i: (i, 0, 0)),   # x (packed)
                pl.BlockSpec((Bb, 1, kC), lambda i: (i, 0, 0)),    # mean
                pl.BlockSpec((Bb, 1, kC), lambda i: (i, 0, 0)),    # stdev
                pl.BlockSpec((1, kC), lambda i: (0, 0)),           # weight
                pl.BlockSpec((1, kC), lambda i: (0, 0)),           # bias
            ],
            out_specs=pl.BlockSpec((Bb, Tp, kC), lambda i: (i, 0, 0)),
        ),
        compiler_params=pltpu.CompilerParams(
            dimension_semantics=("parallel",),
            vmem_limit_bytes=_VMEM_LIMIT),
        cost_estimate=cost,
    )(xp, mean_p, std_p, w_p, b_p)
    return y.reshape(B, T, C)


class RevIN:
    """JAX/Pallas port of the PyTorch RevIN module (forward only)."""

    def __init__(self, num_features: int, eps: float = 1e-05, affine: bool = True):
        self.num_features = num_features
        self.eps = eps
        self.affine = affine
        # Deterministic init (same as the PyTorch module): ones / zeros.
        self.affine_weight = jnp.ones((num_features,), jnp.float32)
        self.affine_bias = jnp.zeros((num_features,), jnp.float32)
        self.mean = None
        self.stdev = None

    def __call__(self, x, mode: str, update_stats: bool = True):
        assert x.ndim == 3
        if mode == "norm":
            y, mean, std = revin_norm(
                x, self.affine_weight, self.affine_bias,
                eps=self.eps, affine=self.affine)
            if update_stats:
                self.mean = mean
                self.stdev = std
            return y
        elif mode == "denorm":
            return revin_denorm(
                x, self.mean, self.stdev, self.affine_weight, self.affine_bias,
                eps=self.eps, affine=self.affine)
        else:
            raise NotImplementedError


# ----------------------------- reference ----------------------------------- #

def _revin_norm_ref(x, w, b, eps):
    mean = jnp.mean(x, axis=1, keepdims=True)
    var = jnp.var(x, axis=1, keepdims=True)            # biased (ddof=0)
    std = jnp.sqrt(var + eps)
    return ((x - mean) / std) * w + b, mean, std


def _revin_denorm_ref(x, mean, std, w, b, eps):
    return ((x - b) / (w + eps * eps)) * std + mean


# ------------------------------- main --------------------------------------- #

if __name__ == "__main__":
    key = jax.random.PRNGKey(0)

    # Primary test: lane-packing path (C=4, T=64 -> packed minor dim = 256).
    B, T, C = 2, 64, 4
    x = jax.random.normal(key, (B, T, C), dtype=jnp.float32) * 3.0 + 1.5

    revin = RevIN(num_features=C, eps=1e-05, affine=True)

    y = revin(x, mode="norm", update_stats=True)
    y = jax.block_until_ready(y)
    x_rec = jax.block_until_ready(revin(y, mode="denorm"))

    y_ref, mean_ref, std_ref = _revin_norm_ref(
        x, revin.affine_weight, revin.affine_bias, revin.eps)
    x_rec_ref = _revin_denorm_ref(
        y_ref, mean_ref, std_ref, revin.affine_weight, revin.affine_bias, revin.eps)

    assert jnp.allclose(y, y_ref, atol=1e-5, rtol=1e-5)
    assert jnp.allclose(revin.mean, mean_ref, atol=1e-5, rtol=1e-5)
    assert jnp.allclose(revin.stdev, std_ref, atol=1e-5, rtol=1e-5)
    assert jnp.allclose(x_rec, x_rec_ref, atol=1e-5, rtol=1e-5)
    assert jnp.allclose(x_rec, x, atol=1e-3, rtol=1e-3)

    # Secondary test: fallback path (C does not divide 128, partial last
    # batch block since B=3 with a batch block of 2).
    B2, T2, C2 = 3, 8, 5
    x2 = jax.random.normal(jax.random.PRNGKey(1), (B2, T2, C2), jnp.float32)
    revin2 = RevIN(num_features=C2, eps=1e-05, affine=True)
    y2 = jax.block_until_ready(revin2(x2, mode="norm"))
    x2_rec = jax.block_until_ready(revin2(y2, mode="denorm"))
    y2_ref, m2_ref, s2_ref = _revin_norm_ref(
        x2, revin2.affine_weight, revin2.affine_bias, revin2.eps)
    assert jnp.allclose(y2, y2_ref, atol=1e-5, rtol=1e-5)
    assert jnp.allclose(revin2.mean, m2_ref, atol=1e-5, rtol=1e-5)
    assert jnp.allclose(revin2.stdev, s2_ref, atol=1e-5, rtol=1e-5)
    assert jnp.allclose(x2_rec, x2, atol=1e-3, rtol=1e-3)

    print("KERNEL_OK")
</pallas_src>

<mosaic_0001>
module attributes {stable_mosaic.version = 11 : i64} {
  func.func @revin_norm_kernel(%arg0: i32, %arg1: memref<1x1x256xf32, #tpu.memory_space<vmem>>, %arg2: memref<1x256xf32, #tpu.memory_space<vmem>>, %arg3: memref<1x256xf32, #tpu.memory_space<vmem>>, %arg4: memref<1x1x256xf32, #tpu.memory_space<vmem>>, %arg5: memref<1x2x4xf32, #tpu.memory_space<vmem>>) attributes {dimension_semantics = [#tpu.dimension_semantics<parallel>], iteration_bounds = array<i64: 2>, scalar_prefetch = 0 : i64, scratch_operands = 0 : i64, tpu.core_type = #tpu.core_type<tc>, window_params = [{transform_indices = @transform_0, window_bounds = array<i64: 1, 1, 256>}, {pipeline_mode = #tpu.pipeline_mode<synchronous>, transform_indices = @transform_1, window_bounds = array<i64: 1, 256>}, {pipeline_mode = #tpu.pipeline_mode<synchronous>, transform_indices = @transform_2, window_bounds = array<i64: 1, 256>}, {transform_indices = @transform_3, window_bounds = array<i64: 1, 1, 256>}, {transform_indices = @transform_4, window_bounds = array<i64: 1, 2, 4>}]} {
    %c0 = arith.constant 0 : index
    %c0_0 = arith.constant 0 : index
    %c0_1 = arith.constant 0 : index
    %0 = vector.load %arg1[%c0, %c0_0, %c0_1] : memref<1x1x256xf32, #tpu.memory_space<vmem>>, vector<1x1x256xf32>
    %1 = tpu.iota {dimensions = array<i32: 0>} : vector<256x4xi32>
    %2 = tpu.iota {dimensions = array<i32: 1>} : vector<256x4xi32>
    %c4_i32 = arith.constant 4 : i32
    %c0_i32 = arith.constant 0 : i32
    %3 = arith.cmpi eq, %c4_i32, %c0_i32 : i32
    %c1_i32 = arith.constant 1 : i32
    %4 = arith.select %3, %c1_i32, %c4_i32 : i32
    %5 = vector.broadcast %4 : i32 to vector<256x4xi32>
    %6 = arith.remsi %1, %5 : vector<256x4xi32>
    %c0_i32_2 = arith.constant 0 : i32
    %7 = vector.broadcast %c0_i32_2 : i32 to vector<256x4xi32>
    %8 = arith.cmpi ne, %6, %7 : vector<256x4xi32>
    %c0_i32_3 = arith.constant 0 : i32
    %9 = vector.broadcast %c0_i32_3 : i32 to vector<256x4xi32>
    %10 = arith.cmpi slt, %6, %9 : vector<256x4xi32>
    %c0_i32_4 = arith.constant 0 : i32
    %11 = arith.cmpi slt, %4, %c0_i32_4 : i32
    %12 = vector.broadcast %11 : i1 to vector<256x4xi1>
    %13 = vector.broadcast %12 : vector<256x4xi1> to vector<256x4xi1>
    %14 = arith.xori %10, %13 : vector<256x4xi1>
    %15 = arith.andi %14, %8 : vector<256x4xi1>
    %16 = vector.broadcast %4 : i32 to vector<256x4xi32>
    %17 = arith.addi %6, %16 : vector<256x4xi32>
    %18 = arith.select %15, %17, %6 : vector<256x4xi1>, vector<256x4xi32>
    %19 = arith.cmpi eq, %18, %2 : vector<256x4xi32>
    %20 = arith.extui %19 : vector<256x4xi1> to vector<256x4xi32>
    %21 = arith.sitofp %20 : vector<256x4xi32> to vector<256x4xf32>
    %22 = tpu.iota {dimensions = array<i32: 0>} : vector<4x256xi32>
    %23 = tpu.iota {dimensions = array<i32: 1>} : vector<4x256xi32>
    %c4_i32_5 = arith.constant 4 : i32
    %c0_i32_6 = arith.constant 0 : i32
    %24 = arith.cmpi eq, %c4_i32_5, %c0_i32_6 : i32
    %c1_i32_7 = arith.constant 1 : i32
    %25 = arith.select %24, %c1_i32_7, %c4_i32_5 : i32
    %26 = vector.broadcast %25 : i32 to vector<4x256xi32>
    %27 = arith.remsi %23, %26 : vector<4x256xi32>
    %c0_i32_8 = arith.constant 0 : i32
    %28 = vector.broadcast %c0_i32_8 : i32 to vector<4x256xi32>
    %29 = arith.cmpi ne, %27, %28 : vector<4x256xi32>
    %c0_i32_9 = arith.constant 0 : i32
    %30 = vector.broadcast %c0_i32_9 : i32 to vector<4x256xi32>
    %31 = arith.cmpi slt, %27, %30 : vector<4x256xi32>
    %c0_i32_10 = arith.constant 0 : i32
    %32 = arith.cmpi slt, %25, %c0_i32_10 : i32
    %33 = vector.broadcast %32 : i1 to vector<4x256xi1>
    %34 = vector.broadcast %33 : vector<4x256xi1> to vector<4x256xi1>
    %35 = arith.xori %31, %34 : vector<4x256xi1>
    %36 = arith.andi %35, %29 : vector<4x256xi1>
    %37 = vector.broadcast %25 : i32 to vector<4x256xi32>
    %38 = arith.addi %27, %37 : vector<4x256xi32>
    %39 = arith.select %36, %38, %27 : vector<4x256xi1>, vector<4x256xi32>
    %40 = arith.cmpi eq, %39, %22 : vector<4x256xi32>
    %41 = arith.extui %40 : vector<4x256xi1> to vector<4x256xi32>
    %42 = arith.sitofp %41 : vector<4x256xi32> to vector<4x256xf32>
    %cst = arith.constant dense<0.000000e+00> : vector<1x256xf32>
    %43 = vector.multi_reduction <add>, %0, %cst [1] : vector<1x1x256xf32> to vector<1x256xf32>
    %cst_11 = arith.constant dense<0.000000e+00> : vector<1x4xf32>
    %44 = tpu.matmul %43, %21, %cst_11 {dimension_numbers = #tpu.dot_dimension_numbers<[1], [0], [0], [1], [0, 0, 1, 1], [], []>} : vector<1x256xf32>, vector<256x4xf32>, vector<1x4xf32> -> vector<1x4xf32>
    %cst_12 = arith.constant 1.562500e-02 : f32
    %45 = vector.broadcast %cst_12 : f32 to vector<1x4xf32>
    %46 = arith.mulf %44, %45 : vector<1x4xf32>
    %cst_13 = arith.constant dense<0.000000e+00> : vector<1x256xf32>
    %47 = tpu.matmul %46, %42, %cst_13 {dimension_numbers = #tpu.dot_dimension_numbers<[1], [0], [0], [1], [0, 0, 1, 1], [], []>} : vector<1x4xf32>, vector<4x256xf32>, vector<1x256xf32> -> vector<1x256xf32>
    %48 = vector.shape_cast %47 : vector<1x256xf32> to vector<1x1x256xf32>
    %49 = arith.subf %0, %48 : vector<1x1x256xf32>
    %50 = arith.mulf %49, %49 : vector<1x1x256xf32>
    %cst_14 = arith.constant dense<0.000000e+00> : vector<1x256xf32>
    %51 = vector.multi_reduction <add>, %50, %cst_14 [1] : vector<1x1x256xf32> to vector<1x256xf32>
    %cst_15 = arith.constant dense<0.000000e+00> : vector<1x4xf32>
    %52 = tpu.matmul %51, %21, %cst_15 {dimension_numbers = #tpu.dot_dimension_numbers<[1], [0], [0], [1], [0, 0, 1, 1], [], []>} : vector<1x256xf32>, vector<256x4xf32>, vector<1x4xf32> -> vector<1x4xf32>
    %cst_16 = arith.constant 1.562500e-02 : f32
    %53 = vector.broadcast %cst_16 : f32 to vector<1x4xf32>
    %54 = arith.mulf %52, %53 : vector<1x4xf32>
    %cst_17 = arith.constant 9.99999974E-6 : f32
    %55 = vector.broadcast %cst_17 : f32 to vector<1x4xf32>
    %56 = arith.addf %54, %55 : vector<1x4xf32>
    %57 = math.sqrt %56 : vector<1x4xf32>
    %cst_18 = arith.constant 9.99999974E-6 : f32
    %58 = vector.broadcast %cst_18 : f32 to vector<1x4xf32>
    %59 = arith.addf %54, %58 : vector<1x4xf32>
    %60 = math.rsqrt %59 : vector<1x4xf32>
    %cst_19 = arith.constant dense<0.000000e+00> : vector<1x256xf32>
    %61 = tpu.matmul %60, %42, %cst_19 {dimension_numbers = #tpu.dot_dimension_numbers<[1], [0], [0], [1], [0, 0, 1, 1], [], []>} : vector<1x4xf32>, vector<4x256xf32>, vector<1x256xf32> -> vector<1x256xf32>
    %62 = vector.shape_cast %61 : vector<1x256xf32> to vector<1x1x256xf32>
    %63 = arith.mulf %49, %62 : vector<1x1x256xf32>
    %c0_20 = arith.constant 0 : index
    %c0_21 = arith.constant 0 : index
    %64 = vector.load %arg2[%c0_20, %c0_21] : memref<1x256xf32, #tpu.memory_space<vmem>>, vector<1x256xf32>
    %c0_22 = arith.constant 0 : index
    %c0_23 = arith.constant 0 : index
    %65 = vector.load %arg3[%c0_22, %c0_23] : memref<1x256xf32, #tpu.memory_space<vmem>>, vector<1x256xf32>
    %66 = vector.shape_cast %64 : vector<1x256xf32> to vector<1x1x256xf32>
    %67 = arith.mulf %63, %66 : vector<1x1x256xf32>
    %68 = vector.shape_cast %65 : vector<1x256xf32> to vector<1x1x256xf32>
    %69 = arith.addf %67, %68 : vector<1x1x256xf32>
    %c0_24 = arith.constant 0 : index
    %c0_25 = arith.constant 0 : index
    %c0_26 = arith.constant 0 : index
    %70 = vector.load %arg4[%c0_24, %c0_25, %c0_26] : memref<1x1x256xf32, #tpu.memory_space<vmem>>, vector<1x1x256xf32>
    tpu.vector_store %arg4[%c0_24, %c0_25, %c0_26], %69 {strides = array<i32>} : memref<1x1x256xf32, #tpu.memory_space<vmem>>, vector<1x1x256xf32>,
    %71 = vector.shape_cast %46 : vector<1x4xf32> to vector<1x1x4xf32>
    %72 = vector.shape_cast %57 : vector<1x4xf32> to vector<1x1x4xf32>
    %73 = tpu.concatenate %71, %72 in 1 : vector<1x1x4xf32>, vector<1x1x4xf32> -> vector<1x2x4xf32>
    %c0_27 = arith.constant 0 : index
    %c0_28 = arith.constant 0 : index
    %c0_29 = arith.constant 0 : index
    %74 = vector.load %arg5[%c0_27, %c0_28, %c0_29] : memref<1x2x4xf32, #tpu.memory_space<vmem>>, vector<1x2x4xf32>
    tpu.vector_store %arg5[%c0_27, %c0_28, %c0_29], %73 {strides = array<i32>} : memref<1x2x4xf32, #tpu.memory_space<vmem>>, vector<1x2x4xf32>,
    return
  }
  func.func @transform_0(%arg0: i32) -> (i32, i32, i32) {
    %c0_i32 = arith.constant 0 : i32
    %c0_i32_0 = arith.constant 0 : i32
    %c0_i32_1 = arith.constant 0 : i32
    return %arg0, %c0_i32, %c0_i32_0 : i32, i32, i32
  }
  func.func @transform_1(%arg0: i32) -> (i32, i32) {
    %c0_i32 = arith.constant 0 : i32
    %c0_i32_0 = arith.constant 0 : i32
    %c0_i32_1 = arith.constant 0 : i32
    return %c0_i32, %c0_i32_0 : i32, i32
  }
  func.func @transform_2(%arg0: i32) -> (i32, i32) {
    %c0_i32 = arith.constant 0 : i32
    %c0_i32_0 = arith.constant 0 : i32
    %c0_i32_1 = arith.constant 0 : i32
    return %c0_i32, %c0_i32_0 : i32, i32
  }
  func.func @transform_3(%arg0: i32) -> (i32, i32, i32) {
    %c0_i32 = arith.constant 0 : i32
    %c0_i32_0 = arith.constant 0 : i32
    %c0_i32_1 = arith.constant 0 : i32
    return %arg0, %c0_i32, %c0_i32_0 : i32, i32, i32
  }
  func.func @transform_4(%arg0: i32) -> (i32, i32, i32) {
    %c0_i32 = arith.constant 0 : i32
    %c0_i32_0 = arith.constant 0 : i32
    %c0_i32_1 = arith.constant 0 : i32
    return %arg0, %c0_i32, %c0_i32_0 : i32, i32, i32
  }
}

</mosaic_0001>

<llo_original>
// kernel: tpu_custom_call.1
$region0: #{tpu_custom_call.1}
  #allocation0 [shape = 'u32[]', space=smem, size = 0x4, offset = 0x4, fixed_abs, tag = 'smem constant byte address 0x4 - core index']
  #allocation1 [shape = 'u32[72,128]{1,0:T(1,128)}', space=vmem, size = 0x9000, scoped, tag = 'internal scratch']
  %s0 = inlined_call_operand.hbm [shape: f32[2,1,256], index: 0, kind: input, shape index: {}]
  %s1 = inlined_call_operand.hbm [shape: f32[1,256], index: 1, kind: input, shape index: {}]
  %s2 = inlined_call_operand.hbm [shape: f32[1,256], index: 2, kind: input, shape index: {}]
  %s3 = inlined_call_operand.hbm [shape: f32[2,1,256], index: 3, kind: output, shape index: {0}]
  %s4 = inlined_call_operand.hbm [shape: f32[2,2,4], index: 4, kind: output, shape index: {1}]
  %5 = xla_tuple %s3, %s4
  %s6 = sld [smem:[#allocation0]]
  $region65: #{tpu_custom_call.1} parent=0
    _
  %s8 = ssub.s32 1, %s6
  %s9 = scalar_select 0, %s8, %s6
  $region1: #{tpu_custom_call.1} parent=0
    #allocation2 [shape = 'u8[2048]{0}', space=vmem, size = 0x800, scoped, tag = 'input window, operand 0']
    #allocation3 [shape = 's32[2]{0}', space=sflag, size = 0x8, scoped, tag = 'scoped memory for tpu_custom_call.1']
    #allocation4 [shape = 's32[2]{0}', space=sflag, size = 0x8, scoped, tag = 'scoped memory for tpu_custom_call.1']
    #allocation5 [shape = 'u8[1024]{0}', space=vmem, size = 0x400, scoped, tag = 'input window, operand 1, single buffered']
    #allocation6 [shape = 's32[1]{0}', space=sflag, size = 0x4, scoped, tag = 'scoped memory for tpu_custom_call.1']
    #allocation7 [shape = 'u8[1024]{0}', space=vmem, size = 0x400, scoped, tag = 'input window, operand 2, single buffered']
    #allocation8 [shape = 'u8[2048]{0}', space=vmem, size = 0x800, scoped, tag = 'output window, operand 0']
    #allocation9 [shape = 'u8[2048]{0}', space=vmem, size = 0x800, scoped, tag = 'output window, operand 1']
    #allocation10 [shape = 's32[2]{0}', space=sflag, size = 0x8, scoped, tag = 'scoped memory for tpu_custom_call.1']
    %10 = vsyncpa [#allocation3], 0
    %s11 = scalar_lea.sflag [#allocation3], 1
    %12 = vsyncpa %s11, 0
    %13 = vsyncpa [#allocation6], 0
    %14 = vsyncpa [#allocation4], 0
    %s15 = scalar_lea.sflag [#allocation4], 1
    %16 = vsyncpa %s15, 0
    %17 = vsyncpa [#allocation10], 0
    %s18 = scalar_lea.sflag [#allocation10], 1
    %19 = vsyncpa %s18, 0
    loop: start=0, step=1, limit=4
    $region2: #{tpu_custom_call.1} parent=1 // loop_pre_header
      _
    $region3: #{tpu_custom_call.1} parent=1 // loop_header
      %s21 = sphi 0, %s25
      %p22 = scmp.ge.s32.totalorder %s21, 4
      %s31 = sphi 0, %s33
      %s34 = sphi 0, %s31
      %s35 = sphi 0, %s34
      %s51 = sphi 0, %s35
      %s55 = sphi 0, %s55
      %s57 = sphi 0, %s55
      %s58 = sphi 0, %s57
      %s72 = sphi 0, %s58
      %s76 = sphi 0, %s76
      %s78 = sphi 0, %s76
      %s79 = sphi 0, %s78
      %s93 = sphi 0, %s79
      %s99 = sphi 0, %s101
      %s102 = sphi 0, %s99
      %s103 = sphi 0, %s102
      %s119 = sphi 0, %s103
      %s125 = sphi 0, %s127
      %s128 = sphi 0, %s125
      %s129 = sphi 0, %s128
      %s145 = sphi 0, %s129
    $region4: #{tpu_custom_call.1} parent=1 // loop_header_branch
      %24 = sbr.rel (%p22) target = $region8
    $region5: #{tpu_custom_call.1} parent=1 // loop_body
      %s26 = ssub.s32 %s21, 1
      %s27 = ssub.s32 %s21, 2
      %s28 = sadd.s32 %s21, 1
      %s29 = ssub.s32 %s21, %s28
      %p30 = scmp.eq.s32.totalorder %s29, 0
      %s32 = sadd.s32 %s31, 1
      %s33 = scalar_select %p30, %s31, %s32
      %p36 = pneg %p30
      %p37 = scmp.eq.s32.totalorder %s21, 1
      %p38 = por %p36, %p37
      %p39 = scmp.ne.s32.totalorder %s31, %s34
      %p40 = scmp.eq.s32.totalorder %s21, 0
      %p41 = por %p39, %p40
      %p42 = scmp.ne.s32.totalorder %s31, %s34
      %p43 = scmp.eq.s32.totalorder %s26, 1
      %p44 = por %p42, %p43
      %p45 = scmp.ne.s32.totalorder %s34, %s35
      %p46 = scmp.eq.s32.totalorder %s26, 0
      %p47 = por %p45, %p46
      %p48 = scmp.ne.s32.totalorder %s34, %s35
      %p49 = scmp.eq.s32.totalorder %s27, 1
      %p50 = por %p48, %p49
      %p52 = scmp.ne.s32.totalorder %s35, %s51
      %p53 = scmp.eq.s32.totalorder %s27, 0
      %p54 = por %p52, %p53
      %s56 = sadd.s32 %s55, 1
      %p59 = scmp.eq.s32.totalorder %s21, 1
      %p60 = scmp.ne.s32.totalorder %s55, %s57
      %p61 = scmp.eq.s32.totalorder %s21, 0
      %p62 = por %p60, %p61
      %p63 = scmp.ne.s32.totalorder %s55, %s57
      %p64 = scmp.eq.s32.totalorder %s26, 1
      %p65 = por %p63, %p64
      %p66 = scmp.ne.s32.totalorder %s57, %s58
      %p67 = scmp.eq.s32.totalorder %s26, 0
      %p68 = por %p66, %p67
      %p69 = scmp.ne.s32.totalorder %s57, %s58
      %p70 = scmp.eq.s32.totalorder %s27, 1
      %p71 = por %p69, %p70
      %p73 = scmp.ne.s32.totalorder %s58, %s72
      %p74 = scmp.eq.s32.totalorder %s27, 0
      %p75 = por %p73, %p74
      %s77 = sadd.s32 %s76, 1
      %p80 = scmp.eq.s32.totalorder %s21, 1
      %p81 = scmp.ne.s32.totalorder %s76, %s78
      %p82 = scmp.eq.s32.totalorder %s21, 0
      %p83 = por %p81, %p82
      %p84 = scmp.ne.s32.totalorder %s76, %s78
      %p85 = scmp.eq.s32.totalorder %s26, 1
      %p86 = por %p84, %p85
      %p87 = scmp.ne.s32.totalorder %s78, %s79
      %p88 = scmp.eq.s32.totalorder %s26, 0
      %p89 = por %p87, %p88
      %p90 = scmp.ne.s32.totalorder %s78, %s79
      %p91 = scmp.eq.s32.totalorder %s27, 1
      %p92 = por %p90, %p91
      %p94 = scmp.ne.s32.totalorder %s79, %s93
      %p95 = scmp.eq.s32.totalorder %s27, 0
      %p96 = por %p94, %p95
      %s97 = ssub.s32 %s21, %s28
      %p98 = scmp.eq.s32.totalorder %s97, 0
      %s100 = sadd.s32 %s99, 1
      %s101 = scalar_select %p98, %s99, %s100
      %p104 = pneg %p98
      %p105 = scmp.eq.s32.totalorder %s21, 1
      %p106 = por %p104, %p105
      %p107 = scmp.ne.s32.totalorder %s99, %s102
      %p108 = scmp.eq.s32.totalorder %s21, 0
      %p109 = por %p107, %p108
      %p110 = scmp.ne.s32.totalorder %s99, %s102
      %p111 = scmp.eq.s32.totalorder %s26, 1
      %p112 = por %p110, %p111
      %p113 = scmp.ne.s32.totalorder %s102, %s103
      %p114 = scmp.eq.s32.totalorder %s26, 0
      %p115 = por %p113, %p114
      %p116 = scmp.ne.s32.totalorder %s102, %s103
      %p117 = scmp.eq.s32.totalorder %s27, 1
      %p118 = por %p116, %p117
      %p120 = scmp.ne.s32.totalorder %s103, %s119
      %p121 = scmp.eq.s32.totalorder %s27, 0
      %p122 = por %p120, %p121
      %s123 = ssub.s32 %s21, %s28
      %p124 = scmp.eq.s32.totalorder %s123, 0
      %s126 = sadd.s32 %s125, 1
      %s127 = scalar_select %p124, %s125, %s126
      %p130 = pneg %p124
      %p131 = scmp.eq.s32.totalorder %s21, 1
      %p132 = por %p130, %p131
      %p133 = scmp.ne.s32.totalorder %s125, %s128
      %p134 = scmp.eq.s32.totalorder %s21, 0
      %p135 = por %p133, %p134
      %p136 = scmp.ne.s32.totalorder %s125, %s128
      %p137 = scmp.eq.s32.totalorder %s26, 1
      %p138 = por %p136, %p137
      %p139 = scmp.ne.s32.totalorder %s128, %s129
      %p140 = scmp.eq.s32.totalorder %s26, 0
      %p141 = por %p139, %p140
      %p142 = scmp.ne.s32.totalorder %s128, %s129
      %p143 = scmp.eq.s32.totalorder %s27, 1
      %p144 = por %p142, %p143
      %p146 = scmp.ne.s32.totalorder %s129, %s145
      %p147 = scmp.eq.s32.totalorder %s27, 0
      %p148 = por %p146, %p147
      %p149 = scmp.le.s32.totalorder 1, %s21
      %p150 = scmp.lt.s32.totalorder %s21, 3
      %p151 = pnand %p149, %p150
      %p152 = pneg %p151
      // Predicated region
      $region9: #{tpu_custom_call.1} parent=5 // pred_check
        _
      $region10: #{tpu_custom_call.1} parent=5 // pred_check_branch
        %154 = sbr.rel (%p151) target = $region12
      $region11: #{tpu_custom_call.1} parent=5 // pred_region
        %s155 = ssub.s32 %s21, 1
        // Predicated region
        $region13: #{tpu_custom_call.1} parent=11 // pred_check
          %p156 = pneg %p68
        $region14: #{tpu_custom_call.1} parent=11 // pred_check_branch
          %158 = sbr.rel (%p156) target = $region16
        $region15: #{tpu_custom_call.1} parent=11 // pred_region
          %160 = vsyncadd [#allocation6], 0
          %s162 = sshll.u32 %s1, 4
          %s163 = int_to_ptr.hbm [resolvable:$true] %s162
          %s164 = sshll.u32 [#allocation5], 4
          %s165 = int_to_ptr.vmem [resolvable:$true] %s164
          %167 = dma.hbm_to_vmem [thread:$0]  %s163, 32, %s165, [#allocation6]
        $region16: #{tpu_custom_call.1} parent=11 // pred_fallthru
          _
        // Predicated region
        $region17: #{tpu_custom_call.1} parent=11 // pred_check
          %p168 = pneg %p89
        $region18: #{tpu_custom_call.1} parent=11 // pred_check_branch
          %170 = sbr.rel (%p168) target = $region20
        $region19: #{tpu_custom_call.1} parent=11 // pred_region
          %172 = vsyncadd [#allocation6], 0
          %s174 = sshll.u32 %s2, 4
          %s175 = int_to_ptr.hbm [resolvable:$true] %s174
          %s176 = sshll.u32 [#allocation7], 4
          %s177 = int_to_ptr.vmem [resolvable:$true] %s176
          %179 = dma.hbm_to_vmem [thread:$0]  %s175, 32, %s177, [#allocation6]
        $region20: #{tpu_custom_call.1} parent=11 // pred_fallthru
          _
      $region12: #{tpu_custom_call.1} parent=5 // pred_fallthru
        _
      %p180 = scmp.lt.s32.totalorder %s21, 2
      // Predicated region
      $region21: #{tpu_custom_call.1} parent=5 // pred_check
        %p181 = pneg %p180
      $region22: #{tpu_custom_call.1} parent=5 // pred_check_branch
        %183 = sbr.rel (%p181) target = $region24
      $region23: #{tpu_custom_call.1} parent=5 // pred_region
        // Predicated region
        $region25: #{tpu_custom_call.1} parent=23 // pred_check
          %p184 = pneg %p41
        $region26: #{tpu_custom_call.1} parent=23 // pred_check_branch
          %186 = sbr.rel (%p184) target = $region28
        $region27: #{tpu_custom_call.1} parent=23 // pred_region
          %s187 = sand.u32 %s31, 1
          %s188 = scalar_lea.sflag [#allocation3], %s187
          %s189 = sand.u32 %s31, 1
          %s190 = smul.addr %s189, 2
          %s191 = scalar_lea.vmem [#allocation2], %s190
          %193 = vsyncadd %s188, 0
          %s194 = smul.addr %s21, 2
          %s195 = scalar_lea.hbm %s0, %s194
          %s197 = sshll.u32 %s195, 4
          %s198 = int_to_ptr.hbm [resolvable:$true] %s197
          %s199 = sshll.u32 %s191, 4
          %s200 = int_to_ptr.vmem [resolvable:$true] %s199
          %202 = dma.hbm_to_vmem [thread:$0]  %s198, 32, %s200, %s188
        $region28: #{tpu_custom_call.1} parent=23 // pred_fallthru
          _
      $region24: #{tpu_custom_call.1} parent=5 // pred_fallthru
        _
      %p203 = scmp.le.s32.totalorder 1, %s21
      %p204 = scmp.lt.s32.totalorder %s21, 3
      %p205 = pnand %p203, %p204
      %p206 = pneg %p205
      // Predicated region
      $region29: #{tpu_custom_call.1} parent=5 // pred_check
        _
      $region30: #{tpu_custom_call.1} parent=5 // pred_check_branch
        %208 = sbr.rel (%p205) target = $region32
      $region31: #{tpu_custom_call.1} parent=5 // pred_region
        %s209 = ssub.s32 %s21, 1
        %s210 = sand.u32 %s34, 1
        %s211 = scalar_lea.sflag [#allocation3], %s210
        %s212 = sand.u32 %s34, 1
        %s213 = smul.addr %s212, 2
        %s214 = scalar_lea.vmem [#allocation2], %s213
        // Predicated region
        $region33: #{tpu_custom_call.1} parent=31 // pred_check
          %p215 = pneg %p47
        $region34: #{tpu_custom_call.1} parent=31 // pred_check_branch
          %217 = sbr.rel (%p215) target = $region36
        $region35: #{tpu_custom_call.1} parent=31 // pred_region
          %219 = dma.done %s211, 32
        $region36: #{tpu_custom_call.1} parent=31 // pred_fallthru
          _
        // Predicated region
        $region37: #{tpu_custom_call.1} parent=31 // pred_check
          %p220 = pneg %p68
        $region38: #{tpu_custom_call.1} parent=31 // pred_check_branch
          %222 = sbr.rel (%p220) target = $region40
        $region39: #{tpu_custom_call.1} parent=31 // pred_region
          %224 = dma.done [#allocation6], 32
        $region40: #{tpu_custom_call.1} parent=31 // pred_fallthru
          _
        // Predicated region
        $region41: #{tpu_custom_call.1} parent=31 // pred_check
          %p225 = pneg %p89
        $region42: #{tpu_custom_call.1} parent=31 // pred_check_branch
          %227 = sbr.rel (%p225) target = $region44
        $region43: #{tpu_custom_call.1} parent=31 // pred_region
          %229 = dma.done [#allocation6], 32
        $region44: #{tpu_custom_call.1} parent=31 // pred_fallthru
          _
        %s230 = sand.u32 %s34, 1
        %s231 = scalar_lea.sflag [#allocation3], %s230
        %s232 = sand.u32 %s34, 1
        %s233 = smul.addr %s232, 2
        %s234 = scalar_lea.vmem [#allocation2], %s233
        %p235 = pneg %p47
        %p236 = pneg %p44
        %p237 = pneg %p68
        %p238 = pneg %p65
        %p239 = pneg %p89
        %p240 = pneg %p86
        %p241 = pneg %p115
        %p242 = pneg %p112
        %s243 = sand.u32 %s102, 1
        %s244 = scalar_lea.sflag [#allocation4], %s243
        %s245 = sand.u32 %s102, 1
        %s246 = smul.addr %s245, 2
        %s247 = scalar_lea.vmem [#allocation8], %s246
        %p248 = pneg %p141
        %p249 = pneg %p138
        %s250 = sand.u32 %s128, 1
        %s251 = scalar_lea.sflag [#allocation10], %s250
        %s252 = sand.u32 %s128, 1
        %s253 = smul.addr %s252, 2
        %s254 = scalar_lea.vmem [#allocation9], %s253
        %v255 = vld [vmem:[%s214] sm:$0x3]
        %v256 = vlaneseq
        %v257 = vshrl.u32 %v256, 7
        %v258 = vadd.s32 %v257, 8
        %v259 = vadd.s32 %v257, 16
        %v260 = vadd.s32 %v257, 24
        %v261 = vadd.s32 %v257, 32
        %v262 = vadd.s32 %v257, 40
        %v263 = vadd.s32 %v257, 48
        %v264 = vadd.s32 %v257, 56
        %v265 = vadd.s32 %v257, 64
        %v266 = vadd.s32 %v257, 72
        %v267 = vadd.s32 %v257, 80
        %v268 = vadd.s32 %v257, 88
        %v269 = vadd.s32 %v257, 96
        %v270 = vadd.s32 %v257, 104
        %v271 = vadd.s32 %v257, 112
        %v272 = vadd.s32 %v257, 120
        %v273 = vadd.s32 %v257, 128
        %v274 = vadd.s32 %v257, 136
        %v275 = vadd.s32 %v257, 144
        %v276 = vadd.s32 %v257, 152
        %v277 = vadd.s32 %v257, 160
        %v278 = vadd.s32 %v257, 168
        %v279 = vadd.s32 %v257, 176
        %v280 = vadd.s32 %v257, 184
        %v281 = vadd.s32 %v257, 192
        %v282 = vadd.s32 %v257, 200
        %v283 = vadd.s32 %v257, 208
        %v284 = vadd.s32 %v257, 216
        %v285 = vadd.s32 %v257, 224
        %v286 = vadd.s32 %v257, 232
        %v287 = vadd.s32 %v257, 240
        %v288 = vadd.s32 %v257, 248
        %v289 = vlaneseq
        %v290 = vand.u32 %v289, 127
        %vm291 = vcmp.lt.s32.totalorder %v257, 0
        %v292 = vsub.s32 0, %v257
        %v293 = vsel %vm291, %v292, %v257
        %v294 = vshrl.u32 %v293, 2
        %v295 = vand.u32 %v293, 3
        %v296 = vsub.s32 0, %v295
        %v297 = vsel %vm291, %v296, %v295
        %vm298 = vcmp.lt.s32.totalorder %v258, 0
        %v299 = vsub.s32 0, %v258
        %v300 = vsel %vm298, %v299, %v258
        %v301 = vshrl.u32 %v300, 2
        %v302 = vand.u32 %v300, 3
        %v303 = vsub.s32 0, %v302
        %v304 = vsel %vm298, %v303, %v302
        %vm305 = vcmp.lt.s32.totalorder %v259, 0
        %v306 = vsub.s32 0, %v259
        %v307 = vsel %vm305, %v306, %v259
        %v308 = vshrl.u32 %v307, 2
        %v309 = vand.u32 %v307, 3
        %v310 = vsub.s32 0, %v309
        %v311 = vsel %vm305, %v310, %v309
        %vm312 = vcmp.lt.s32.totalorder %v260, 0
        %v313 = vsub.s32 0, %v260
        %v314 = vsel %vm312, %v313, %v260
        %v315 = vshrl.u32 %v314, 2
        %v316 = vand.u32 %v314, 3
        %v317 = vsub.s32 0, %v316
        %v318 = vsel %vm312, %v317, %v316
        %vm319 = vcmp.lt.s32.totalorder %v261, 0
        %v320 = vsub.s32 0, %v261
        %v321 = vsel %vm319, %v320, %v261
        %v322 = vshrl.u32 %v321, 2
        %v323 = vand.u32 %v321, 3
        %v324 = vsub.s32 0, %v323
        %v325 = vsel %vm319, %v324, %v323
        %vm326 = vcmp.lt.s32.totalorder %v262, 0
        %v327 = vsub.s32 0, %v262
        %v328 = vsel %vm326, %v327, %v262
        %v329 = vshrl.u32 %v328, 2
        %v330 = vand.u32 %v328, 3
        %v331 = vsub.s32 0, %v330
        %v332 = vsel %vm326, %v331, %v330
        %vm333 = vcmp.lt.s32.totalorder %v263, 0
        %v334 = vsub.s32 0, %v263
        %v335 = vsel %vm333, %v334, %v263
        %v336 = vshrl.u32 %v335, 2
        %v337 = vand.u32 %v335, 3
        %v338 = vsub.s32 0, %v337
        %v339 = vsel %vm333, %v338, %v337
        %vm340 = vcmp.lt.s32.totalorder %v264, 0
        %v341 = vsub.s32 0, %v264
        %v342 = vsel %vm340, %v341, %v264
        %v343 = vshrl.u32 %v342, 2
        %v344 = vand.u32 %v342, 3
        %v345 = vsub.s32 0, %v344
        %v346 = vsel %vm340, %v345, %v344
        %vm347 = vcmp.lt.s32.totalorder %v265, 0
        %v348 = vsub.s32 0, %v265
        %v349 = vsel %vm347, %v348, %v265
        %v350 = vshrl.u32 %v349, 2
        %v351 = vand.u32 %v349, 3
        %v352 = vsub.s32 0, %v351
        %v353 = vsel %vm347, %v352, %v351
        %vm354 = vcmp.lt.s32.totalorder %v266, 0
        %v355 = vsub.s32 0, %v266
        %v356 = vsel %vm354, %v355, %v266
        %v357 = vshrl.u32 %v356, 2
        %v358 = vand.u32 %v356, 3
        %v359 = vsub.s32 0, %v358
        %v360 = vsel %vm354, %v359, %v358
        %vm361 = vcmp.lt.s32.totalorder %v267, 0
        %v362 = vsub.s32 0, %v267
        %v363 = vsel %vm361, %v362, %v267
        %v364 = vshrl.u32 %v363, 2
        %v365 = vand.u32 %v363, 3
        %v366 = vsub.s32 0, %v365
        %v367 = vsel %vm361, %v366, %v365
        %vm368 = vcmp.lt.s32.totalorder %v268, 0
        %v369 = vsub.s32 0, %v268
        %v370 = vsel %vm368, %v369, %v268
        %v371 = vshrl.u32 %v370, 2
        %v372 = vand.u32 %v370, 3
        %v373 = vsub.s32 0, %v372
        %v374 = vsel %vm368, %v373, %v372
        %vm375 = vcmp.lt.s32.totalorder %v269, 0
        %v376 = vsub.s32 0, %v269
        %v377 = vsel %vm375, %v376, %v269
        %v378 = vshrl.u32 %v377, 2
        %v379 = vand.u32 %v377, 3
        %v380 = vsub.s32 0, %v379
        %v381 = vsel %vm375, %v380, %v379
        %vm382 = vcmp.lt.s32.totalorder %v270, 0
        %v383 = vsub.s32 0, %v270
        %v384 = vsel %vm382, %v383, %v270
        %v385 = vshrl.u32 %v384, 2
        %v386 = vand.u32 %v384, 3
        %v387 = vsub.s32 0, %v386
        %v388 = vsel %vm382, %v387, %v386
        %vm389 = vcmp.lt.s32.totalorder %v271, 0
        %v390 = vsub.s32 0, %v271
        %v391 = vsel %vm389, %v390, %v271
        %v392 = vshrl.u32 %v391, 2
        %v393 = vand.u32 %v391, 3
        %v394 = vsub.s32 0, %v393
        %v395 = vsel %vm389, %v394, %v393
        %vm396 = vcmp.lt.s32.totalorder %v272, 0
        %v397 = vsub.s32 0, %v272
        %v398 = vsel %vm396, %v397, %v272
        %v399 = vshrl.u32 %v398, 2
        %v400 = vand.u32 %v398, 3
        %v401 = vsub.s32 0, %v400
        %v402 = vsel %vm396, %v401, %v400
        %vm403 = vcmp.lt.s32.totalorder %v273, 0
        %v404 = vsub.s32 0, %v273
        %v405 = vsel %vm403, %v404, %v273
        %v406 = vshrl.u32 %v405, 2
        %v407 = vand.u32 %v405, 3
        %v408 = vsub.s32 0, %v407
        %v409 = vsel %vm403, %v408, %v407
        %vm410 = vcmp.lt.s32.totalorder %v274, 0
        %v411 = vsub.s32 0, %v274
        %v412 = vsel %vm410, %v411, %v274
        %v413 = vshrl.u32 %v412, 2
        %v414 = vand.u32 %v412, 3
        %v415 = vsub.s32 0, %v414
        %v416 = vsel %vm410, %v415, %v414
        %vm417 = vcmp.lt.s32.totalorder %v275, 0
        %v418 = vsub.s32 0, %v275
        %v419 = vsel %vm417, %v418, %v275
        %v420 = vshrl.u32 %v419, 2
        %v421 = vand.u32 %v419, 3
        %v422 = vsub.s32 0, %v421
        %v423 = vsel %vm417, %v422, %v421
        %vm424 = vcmp.lt.s32.totalorder %v276, 0
        %v425 = vsub.s32 0, %v276
        %v426 = vsel %vm424, %v425, %v276
        %v427 = vshrl.u32 %v426, 2
        %v428 = vand.u32 %v426, 3
        %v429 = vsub.s32 0, %v428
        %v430 = vsel %vm424, %v429, %v428
        %vm431 = vcmp.lt.s32.totalorder %v277, 0
        %v432 = vsub.s32 0, %v277
        %v433 = vsel %vm431, %v432, %v277
        %v434 = vshrl.u32 %v433, 2
        %v435 = vand.u32 %v433, 3
        %v436 = vsub.s32 0, %v435
        %v437 = vsel %vm431, %v436, %v435
        %vm438 = vcmp.lt.s32.totalorder %v278, 0
        %v439 = vsub.s32 0, %v278
        %v440 = vsel %vm438, %v439, %v278
        %v441 = vshrl.u32 %v440, 2
        %v442 = vand.u32 %v440, 3
        %v443 = vsub.s32 0, %v442
        %v444 = vsel %vm438, %v443, %v442
        %vm445 = vcmp.lt.s32.totalorder %v279, 0
        %v446 = vsub.s32 0, %v279
        %v447 = vsel %vm445, %v446, %v279
        %v448 = vshrl.u32 %v447, 2
        %v449 = vand.u32 %v447, 3
        %v450 = vsub.s32 0, %v449
        %v451 = vsel %vm445, %v450, %v449
        %vm452 = vcmp.lt.s32.totalorder %v280, 0
        %v453 = vsub.s32 0, %v280
        %v454 = vsel %vm452, %v453, %v280
        %v455 = vshrl.u32 %v454, 2
        %v456 = vand.u32 %v454, 3
        %v457 = vsub.s32 0, %v456
        %v458 = vsel %vm452, %v457, %v456
        %vm459 = vcmp.lt.s32.totalorder %v281, 0
        %v460 = vsub.s32 0, %v281
        %v461 = vsel %vm459, %v460, %v281
        %v462 = vshrl.u32 %v461, 2
        %v463 = vand.u32 %v461, 3
        %v464 = vsub.s32 0, %v463
        %v465 = vsel %vm459, %v464, %v463
        %vm466 = vcmp.lt.s32.totalorder %v282, 0
        %v467 = vsub.s32 0, %v282
        %v468 = vsel %vm466, %v467, %v282
        %v469 = vshrl.u32 %v468, 2
        %v470 = vand.u32 %v468, 3
        %v471 = vsub.s32 0, %v470
        %v472 = vsel %vm466, %v471, %v470
        %vm473 = vcmp.lt.s32.totalorder %v283, 0
        %v474 = vsub.s32 0, %v283
        %v475 = vsel %vm473, %v474, %v283
        %v476 = vshrl.u32 %v475, 2
        %v477 = vand.u32 %v475, 3
        %v478 = vsub.s32 0, %v477
        %v479 = vsel %vm473, %v478, %v477
        %vm480 = vcmp.lt.s32.totalorder %v284, 0
        %v481 = vsub.s32 0, %v284
        %v482 = vsel %vm480, %v481, %v284
        %v483 = vshrl.u32 %v482, 2
        %v484 = vand.u32 %v482, 3
        %v485 = vsub.s32 0, %v484
        %v486 = vsel %vm480, %v485, %v484
        %vm487 = vcmp.lt.s32.totalorder %v285, 0
        %v488 = vsub.s32 0, %v285
        %v489 = vsel %vm487, %v488, %v285
        %v490 = vshrl.u32 %v489, 2
        %v491 = vand.u32 %v489, 3
        %v492 = vsub.s32 0, %v491
        %v493 = vsel %vm487, %v492, %v491
        %vm494 = vcmp.lt.s32.totalorder %v286, 0
        %v495 = vsub.s32 0, %v286
        %v496 = vsel %vm494, %v495, %v286
        %v497 = vshrl.u32 %v496, 2
        %v498 = vand.u32 %v496, 3
        %v499 = vsub.s32 0, %v498
        %v500 = vsel %vm494, %v499, %v498
        %vm501 = vcmp.lt.s32.totalorder %v287, 0
        %v502 = vsub.s32 0, %v287
        %v503 = vsel %vm501, %v502, %v287
        %v504 = vshrl.u32 %v503, 2
        %v505 = vand.u32 %v503, 3
        %v506 = vsub.s32 0, %v505
        %v507 = vsel %vm501, %v506, %v505
        %vm508 = vcmp.lt.s32.totalorder %v288, 0
        %v509 = vsub.s32 0, %v288
        %v510 = vsel %vm508, %v509, %v288
        %v511 = vshrl.u32 %v510, 2
        %v512 = vand.u32 %v510, 3
        %v513 = vsub.s32 0, %v512
        %v514 = vsel %vm508, %v513, %v512
        %vm515 = vcmp.ne.s32.totalorder %v297, 0
        %vm516 = vcmp.ne.s32.totalorder %v304, 0
        %vm517 = vcmp.ne.s32.totalorder %v311, 0
        %vm518 = vcmp.ne.s32.totalorder %v318, 0
        %vm519 = vcmp.ne.s32.totalorder %v325, 0
        %vm520 = vcmp.ne.s32.totalorder %v332, 0
        %vm521 = vcmp.ne.s32.totalorder %v339, 0
        %vm522 = vcmp.ne.s32.totalorder %v346, 0
        %vm523 = vcmp.ne.s32.totalorder %v353, 0
        %vm524 = vcmp.ne.s32.totalorder %v360, 0
        %vm525 = vcmp.ne.s32.totalorder %v367, 0
        %vm526 = vcmp.ne.s32.totalorder %v374, 0
        %vm527 = vcmp.ne.s32.totalorder %v381, 0
        %vm528 = vcmp.ne.s32.totalorder %v388, 0
        %vm529 = vcmp.ne.s32.totalorder %v395, 0
        %vm530 = vcmp.ne.s32.totalorder %v402, 0
        %vm531 = vcmp.ne.s32.totalorder %v409, 0
        %vm532 = vcmp.ne.s32.totalorder %v416, 0
        %vm533 = vcmp.ne.s32.totalorder %v423, 0
        %vm534 = vcmp.ne.s32.totalorder %v430, 0
        %vm535 = vcmp.ne.s32.totalorder %v437, 0
        %vm536 = vcmp.ne.s32.totalorder %v444, 0
        %vm537 = vcmp.ne.s32.totalorder %v451, 0
        %vm538 = vcmp.ne.s32.totalorder %v458, 0
        %vm539 = vcmp.ne.s32.totalorder %v465, 0
        %vm540 = vcmp.ne.s32.totalorder %v472, 0
        %vm541 = vcmp.ne.s32.totalorder %v479, 0
        %vm542 = vcmp.ne.s32.totalorder %v486, 0
        %vm543 = vcmp.ne.s32.totalorder %v493, 0
        %vm544 = vcmp.ne.s32.totalorder %v500, 0
        %vm545 = vcmp.ne.s32.totalorder %v507, 0
        %vm546 = vcmp.ne.s32.totalorder %v514, 0
        %vm547 = vcmp.lt.s32.totalorder %v297, 0
        %vm548 = vcmp.lt.s32.totalorder %v304, 0
        %vm549 = vcmp.lt.s32.totalorder %v311, 0
        %vm550 = vcmp.lt.s32.totalorder %v318, 0
        %vm551 = vcmp.lt.s32.totalorder %v325, 0
        %vm552 = vcmp.lt.s32.totalorder %v332, 0
        %vm553 = vcmp.lt.s32.totalorder %v339, 0
        %vm554 = vcmp.lt.s32.totalorder %v346, 0
        %vm555 = vcmp.lt.s32.totalorder %v353, 0
        %vm556 = vcmp.lt.s32.totalorder %v360, 0
        %vm557 = vcmp.lt.s32.totalorder %v367, 0
        %vm558 = vcmp.lt.s32.totalorder %v374, 0
        %vm559 = vcmp.lt.s32.totalorder %v381, 0
        %vm560 = vcmp.lt.s32.totalorder %v388, 0
        %vm561 = vcmp.lt.s32.totalorder %v395, 0
        %vm562 = vcmp.lt.s32.totalorder %v402, 0
        %vm563 = vcmp.lt.s32.totalorder %v409, 0
        %vm564 = vcmp.lt.s32.totalorder %v416, 0
        %vm565 = vcmp.lt.s32.totalorder %v423, 0
        %vm566 = vcmp.lt.s32.totalorder %v430, 0
        %vm567 = vcmp.lt.s32.totalorder %v437, 0
        %vm568 = vcmp.lt.s32.totalorder %v444, 0
        %vm569 = vcmp.lt.s32.totalorder %v451, 0
        %vm570 = vcmp.lt.s32.totalorder %v458, 0
        %vm571 = vcmp.lt.s32.totalorder %v465, 0
        %vm572 = vcmp.lt.s32.totalorder %v472, 0
        %vm573 = vcmp.lt.s32.totalorder %v479, 0
        %vm574 = vcmp.lt.s32.totalorder %v486, 0
        %vm575 = vcmp.lt.s32.totalorder %v493, 0
        %vm576 = vcmp.lt.s32.totalorder %v500, 0
        %vm577 = vcmp.lt.s32.totalorder %v507, 0
        %vm578 = vcmp.lt.s32.totalorder %v514, 0
        %vm579 = vmand %vm547, %vm515
        %vm580 = vmand %vm548, %vm516
        %vm581 = vmand %vm549, %vm517
        %vm582 = vmand %vm550, %vm518
        %vm583 = vmand %vm551, %vm519
        %vm584 = vmand %vm552, %vm520
        %vm585 = vmand %vm553, %vm521
        %vm586 = vmand %vm554, %vm522
        %vm587 = vmand %vm555, %vm523
        %vm588 = vmand %vm556, %vm524
        %vm589 = vmand %vm557, %vm525
        %vm590 = vmand %vm558, %vm526
        %vm591 = vmand %vm559, %vm527
        %vm592 = vmand %vm560, %vm528
        %vm593 = vmand %vm561, %vm529
        %vm594 = vmand %vm562, %vm530
        %vm595 = vmand %vm563, %vm531
        %vm596 = vmand %vm564, %vm532
        %vm597 = vmand %vm565, %vm533
        %vm598 = vmand %vm566, %vm534
        %vm599 = vmand %vm567, %vm535
        %vm600 = vmand %vm568, %vm536
        %vm601 = vmand %vm569, %vm537
        %vm602 = vmand %vm570, %vm538
        %vm603 = vmand %vm571, %vm539
        %vm604 = vmand %vm572, %vm540
        %vm605 = vmand %vm573, %vm541
        %vm606 = vmand %vm574, %vm542
        %vm607 = vmand %vm575, %vm543
        %vm608 = vmand %vm576, %vm544
        %vm609 = vmand %vm577, %vm545
        %vm610 = vmand %vm578, %vm546
        %v611 = vadd.s32 %v297, 4
        %v612 = vadd.s32 %v304, 4
        %v613 = vadd.s32 %v311, 4
        %v614 = vadd.s32 %v318, 4
        %v615 = vadd.s32 %v325, 4
        %v616 = vadd.s32 %v332, 4
        %v617 = vadd.s32 %v339, 4
        %v618 = vadd.s32 %v346, 4
        %v619 = vadd.s32 %v353, 4
        %v620 = vadd.s32 %v360, 4
        %v621 = vadd.s32 %v367, 4
        %v622 = vadd.s32 %v374, 4
        %v623 = vadd.s32 %v381, 4
        %v624 = vadd.s32 %v388, 4
        %v625 = vadd.s32 %v395, 4
        %v626 = vadd.s32 %v402, 4
        %v627 = vadd.s32 %v409, 4
        %v628 = vadd.s32 %v416, 4
        %v629 = vadd.s32 %v423, 4
        %v630 = vadd.s32 %v430, 4
        %v631 = vadd.s32 %v437, 4
        %v632 = vadd.s32 %v444, 4
        %v633 = vadd.s32 %v451, 4
        %v634 = vadd.s32 %v458, 4
        %v635 = vadd.s32 %v465, 4
        %v636 = vadd.s32 %v472, 4
        %v637 = vadd.s32 %v479, 4
        %v638 = vadd.s32 %v486, 4
        %v639 = vadd.s32 %v493, 4
        %v640 = vadd.s32 %v500, 4
        %v641 = vadd.s32 %v507, 4
        %v642 = vadd.s32 %v514, 4
        %v643 = vsel %vm579, %v611, %v297
        %v644 = vsel %vm580, %v612, %v304
        %v645 = vsel %vm581, %v613, %v311
        %v646 = vsel %vm582, %v614, %v318
        %v647 = vsel %vm583, %v615, %v325
        %v648 = vsel %vm584, %v616, %v332
        %v649 = vsel %vm585, %v617, %v339
        %v650 = vsel %vm586, %v618, %v346
        %v651 = vsel %vm587, %v619, %v353
        %v652 = vsel %vm588, %v620, %v360
        %v653 = vsel %vm589, %v621, %v367
        %v654 = vsel %vm590, %v622, %v374
        %v655 = vsel %vm591, %v623, %v381
        %v656 = vsel %vm592, %v624, %v388
        %v657 = vsel %vm593, %v625, %v395
        %v658 = vsel %vm594, %v626, %v402
        %v659 = vsel %vm595, %v627, %v409
        %v660 = vsel %vm596, %v628, %v416
        %v661 = vsel %vm597, %v629, %v423
        %v662 = vsel %vm598, %v630, %v430
        %v663 = vsel %vm599, %v631, %v437
        %v664 = vsel %vm600, %v632, %v444
        %v665 = vsel %vm601, %v633, %v451
        %v666 = vsel %vm602, %v634, %v458
        %v667 = vsel %vm603, %v635, %v465
        %v668 = vsel %vm604, %v636, %v472
        %v669 = vsel %vm605, %v637, %v479
        %v670 = vsel %vm606, %v638, %v486
        %v671 = vsel %vm607, %v639, %v493
        %v672 = vsel %vm608, %v640, %v500
        %v673 = vsel %vm609, %v641, %v507
        %v674 = vsel %vm610, %v642, %v514
        %vm675 = vcmp.eq.s32.totalorder %v643, %v290
        %vm676 = vcmp.eq.s32.totalorder %v644, %v290
        %vm677 = vcmp.eq.s32.totalorder %v645, %v290
        %vm678 = vcmp.eq.s32.totalorder %v646, %v290
        %vm679 = vcmp.eq.s32.totalorder %v647, %v290
        %vm680 = vcmp.eq.s32.totalorder %v648, %v290
        %vm681 = vcmp.eq.s32.totalorder %v649, %v290
        %vm682 = vcmp.eq.s32.totalorder %v650, %v290
        %vm683 = vcmp.eq.s32.totalorder %v651, %v290
        %vm684 = vcmp.eq.s32.totalorder %v652, %v290
        %vm685 = vcmp.eq.s32.totalorder %v653, %v290
        %vm686 = vcmp.eq.s32.totalorder %v654, %v290
        %vm687 = vcmp.eq.s32.totalorder %v655, %v290
        %vm688 = vcmp.eq.s32.totalorder %v656, %v290
        %vm689 = vcmp.eq.s32.totalorder %v657, %v290
        %vm690 = vcmp.eq.s32.totalorder %v658, %v290
        %vm691 = vcmp.eq.s32.totalorder %v659, %v290
        %vm692 = vcmp.eq.s32.totalorder %v660, %v290
        %vm693 = vcmp.eq.s32.totalorder %v661, %v290
        %vm694 = vcmp.eq.s32.totalorder %v662, %v290
        %vm695 = vcmp.eq.s32.totalorder %v663, %v290
        %vm696 = vcmp.eq.s32.totalorder %v664, %v290
        %vm697 = vcmp.eq.s32.totalorder %v665, %v290
        %vm698 = vcmp.eq.s32.totalorder %v666, %v290
        %vm699 = vcmp.eq.s32.totalorder %v667, %v290
        %vm700 = vcmp.eq.s32.totalorder %v668, %v290
        %vm701 = vcmp.eq.s32.totalorder %v669, %v290
        %vm702 = vcmp.eq.s32.totalorder %v670, %v290
        %vm703 = vcmp.eq.s32.totalorder %v671, %v290
        %vm704 = vcmp.eq.s32.totalorder %v672, %v290
        %vm705 = vcmp.eq.s32.totalorder %v673, %v290
        %vm706 = vcmp.eq.s32.totalorder %v674, %v290
        %v707 = vsel %vm675, 1, 0
        %v708 = vsel %vm676, 1, 0
        %v709 = vsel %vm677, 1, 0
        %v710 = vsel %vm678, 1, 0
        %v711 = vsel %vm679, 1, 0
        %v712 = vsel %vm680, 1, 0
        %v713 = vsel %vm681, 1, 0
        %v714 = vsel %vm682, 1, 0
        %v715 = vsel %vm683, 1, 0
        %v716 = vsel %vm684, 1, 0
        %v717 = vsel %vm685, 1, 0
        %v718 = vsel %vm686, 1, 0
        %v719 = vsel %vm687, 1, 0
        %v720 = vsel %vm688, 1, 0
        %v721 = vsel %vm689, 1, 0
        %v722 = vsel %vm690, 1, 0
        %v723 = vsel %vm691, 1, 0
        %v724 = vsel %vm692, 1, 0
        %v725 = vsel %vm693, 1, 0
        %v726 = vsel %vm694, 1, 0
        %v727 = vsel %vm695, 1, 0
        %v728 = vsel %vm696, 1, 0
        %v729 = vsel %vm697, 1, 0
        %v730 = vsel %vm698, 1, 0
        %v731 = vsel %vm699, 1, 0
        %v732 = vsel %vm700, 1, 0
        %v733 = vsel %vm701, 1, 0
        %v734 = vsel %vm702, 1, 0
        %v735 = vsel %vm703, 1, 0
        %v736 = vsel %vm704, 1, 0
        %v737 = vsel %vm705, 1, 0
        %v738 = vsel %vm706, 1, 0
        %v739 = vcvt.s32.f32 %v707
        %v740 = vcvt.s32.f32 %v708
        %v741 = vcvt.s32.f32 %v709
        %v742 = vcvt.s32.f32 %v710
        %v743 = vcvt.s32.f32 %v711
        %v744 = vcvt.s32.f32 %v712
        %v745 = vcvt.s32.f32 %v713
        %v746 = vcvt.s32.f32 %v714
        %v747 = vcvt.s32.f32 %v715
        %v748 = vcvt.s32.f32 %v716
        %v749 = vcvt.s32.f32 %v717
        %v750 = vcvt.s32.f32 %v718
        %v751 = vcvt.s32.f32 %v719
        %v752 = vcvt.s32.f32 %v720
        %v753 = vcvt.s32.f32 %v721
        %v754 = vcvt.s32.f32 %v722
        %v755 = vcvt.s32.f32 %v723
        %v756 = vcvt.s32.f32 %v724
        %v757 = vcvt.s32.f32 %v725
        %v758 = vcvt.s32.f32 %v726
        %v759 = vcvt.s32.f32 %v727
        %v760 = vcvt.s32.f32 %v728
        %v761 = vcvt.s32.f32 %v729
        %v762 = vcvt.s32.f32 %v730
        %v763 = vcvt.s32.f32 %v731
        %v764 = vcvt.s32.f32 %v732
        %v765 = vcvt.s32.f32 %v733
        %v766 = vcvt.s32.f32 %v734
        %v767 = vcvt.s32.f32 %v735
        %v768 = vcvt.s32.f32 %v736
        %v769 = vcvt.s32.f32 %v737
        %v770 = vcvt.s32.f32 %v738
        %v771 = vadd.s32 %v290, 128
        %vm772 = vcmp.lt.s32.totalorder %v290, 0
        %v773 = vsub.s32 0, %v290
        %v774 = vsel %vm772, %v773, %v290
        %v775 = vshrl.u32 %v774, 2
        %v776 = vand.u32 %v774, 3
        %v777 = vsub.s32 0, %v776
        %v778 = vsel %vm772, %v777, %v776
        %vm779 = vcmp.lt.s32.totalorder %v771, 0
        %v780 = vsub.s32 0, %v771
        %v781 = vsel %vm779, %v780, %v771
        %v782 = vshrl.u32 %v781, 2
        %v783 = vand.u32 %v781, 3
        %v784 = vsub.s32 0, %v783
        %v785 = vsel %vm779, %v784, %v783
        %vm786 = vcmp.ne.s32.totalorder %v778, 0
        %vm787 = vcmp.ne.s32.totalorder %v785, 0
        %vm788 = vcmp.lt.s32.totalorder %v778, 0
        %vm789 = vcmp.lt.s32.totalorder %v785, 0
        %vm790 = vmand %vm788, %vm786
        %vm791 = vmand %vm789, %vm787
        %v792 = vadd.s32 %v778, 4
        %v793 = vadd.s32 %v785, 4
        %v794 = vsel %vm790, %v792, %v778
        %v795 = vsel %vm791, %v793, %v785
        %vm796 = vcmp.eq.s32.totalorder %v794, %v257
        %vm797 = vcmp.eq.s32.totalorder %v795, %v257
        %v798 = vsel %vm796, 1, 0
        %v799 = vsel %vm797, 1, 0
        %v800 = vcvt.s32.f32 %v798
        %v801 = vcvt.s32.f32 %v799
        %v802 = vadd.f32 %v255, 0.0
        %v804 = vperm.slane %v802, 0
        %v805 = vperm.slane %v802, 1
        %808 = vmatpush.msra.mxu0 %v754
        %809 = vmatpush.msra.mxu0 %v753
        %810 = vmatpush.msra.mxu0 %v752
        %811 = vmatpush.msra.mxu0 %v751
        %812 = vmatpush.msra.mxu0 %v750
        %813 = vmatpush.msra.mxu0 %v749
        %814 = vmatpush.msra.mxu0 %v748
        %815 = vmatpush.msra.mxu0 %v747
        %816 = vmatpush.msra.mxu0 %v746
        %817 = vmatpush.msra.mxu0 %v745
        %818 = vmatpush.msra.mxu0 %v744
        %819 = vmatpush.msra.mxu0 %v743
        %820 = vmatpush.msra.mxu0 %v742
        %821 = vmatpush.msra.mxu0 %v741
        %822 = vmatpush.msra.mxu0 %v740
        %823 = vmatpush.msra.mxu0 %v739
        %824 = vmatmul.f32.gmra.mxu0 %v804
        %v825 = vpop.f32.mrf.mxu0
        %v826 = vadd.f32 0.0, %v825
        %827 = vdwg.mxu0
        %828 = vmatpush.msra.mxu0 %v770
        %829 = vmatpush.msra.mxu0 %v769
        %830 = vmatpush.msra.mxu0 %v768
        %831 = vmatpush.msra.mxu0 %v767
        %832 = vmatpush.msra.mxu0 %v766
        %833 = vmatpush.msra.mxu0 %v765
        %834 = vmatpush.msra.mxu0 %v764
        %835 = vmatpush.msra.mxu0 %v763
        %836 = vmatpush.msra.mxu0 %v762
        %837 = vmatpush.msra.mxu0 %v761
        %838 = vmatpush.msra.mxu0 %v760
        %839 = vmatpush.msra.mxu0 %v759
        %840 = vmatpush.msra.mxu0 %v758
        %841 = vmatpush.msra.mxu0 %v757
        %842 = vmatpush.msra.mxu0 %v756
        %843 = vmatpush.msra.mxu0 %v755
        %844 = vmatmul.f32.gmra.mxu0 %v805
        %v845 = vpop.f32.mrf.mxu0
        %v846 = vadd.f32 %v826, %v845
        %847 = vdwg.mxu0
        %v848 = vmul.f32 %v846, 0.015625
        %vm849 = vcmask 31744
        %v851 = vsel %vm849, %v848, 0
        %vm853 = vcmask 1043456
        %v855 = vsel %vm853, %v800, 0
        %v858 = vsel %vm853, %v801, 0
        %860 = vmatpush.msra.mxu0 0.0
        %861 = vmatpush.msra.mxu0 0.0
        %862 = vmatpush.msra.mxu0 0.0
        %863 = vmatpush.msra.mxu0 0.0
        %864 = vmatpush.msra.mxu0 0.0
        %865 = vmatpush.msra.mxu0 0.0
        %866 = vmatpush.msra.mxu0 0.0
        %867 = vmatpush.msra.mxu0 0.0
        %868 = vmatpush.msra.mxu0 0.0
        %869 = vmatpush.msra.mxu0 0.0
        %870 = vmatpush.msra.mxu0 0.0
        %871 = vmatpush.msra.mxu0 0.0
        %872 = vmatpush.msra.mxu0 0.0
        %873 = vmatpush.msra.mxu0 0.0
        %874 = vmatpush.msra.mxu0 0.0
        %875 = vmatpush.msra.mxu0 %v855
        %876 = vmatmul.f32.gmra.mxu0 %v851
        %v877 = vpop.f32.mrf.mxu0
        %v878 = vadd.f32 0.0, %v877
        %879 = vdwg.mxu0
        %880 = vmatpush.msra.mxu0 0.0
        %881 = vmatpush.msra.mxu0 0.0
        %882 = vmatpush.msra.mxu0 0.0
        %883 = vmatpush.msra.mxu0 0.0
        %884 = vmatpush.msra.mxu0 0.0
        %885 = vmatpush.msra.mxu0 0.0
        %886 = vmatpush.msra.mxu0 0.0
        %887 = vmatpush.msra.mxu0 0.0
        %888 = vmatpush.msra.mxu0 0.0
        %889 = vmatpush.msra.mxu0 0.0
        %890 = vmatpush.msra.mxu0 0.0
        %891 = vmatpush.msra.mxu0 0.0
        %892 = vmatpush.msra.mxu0 0.0
        %893 = vmatpush.msra.mxu0 0.0
        %894 = vmatpush.msra.mxu0 0.0
        %895 = vmatpush.msra.mxu0 %v858
        %896 = vmatmul.f32.gmra.mxu0 %v851
        %v897 = vpop.f32.mrf.mxu0
        %v898 = vadd.f32 0.0, %v897
        %899 = vdwg.mxu0
        %v902 = vrot.slane %v898, 7
        %vm903 = vcmask 1040384
        %v904 = vsel %vm903, %v878, %v902
        %v906 = vsub.f32 %v255, %v904
        %v907 = vmul.f32 %v906, %v906
        %v908 = vadd.f32 %v907, 0.0
        %v910 = vperm.slane %v908, 0
        %v911 = vperm.slane %v908, 1
        %914 = vmatpush.msra.mxu0 %v754
        %915 = vmatpush.msra.mxu0 %v753
        %916 = vmatpush.msra.mxu0 %v752
        %917 = vmatpush.msra.mxu0 %v751
        %918 = vmatpush.msra.mxu0 %v750
        %919 = vmatpush.msra.mxu0 %v749
        %920 = vmatpush.msra.mxu0 %v748
        %921 = vmatpush.msra.mxu0 %v747
        %922 = vmatpush.msra.mxu0 %v746
        %923 = vmatpush.msra.mxu0 %v745
        %924 = vmatpush.msra.mxu0 %v744
        %925 = vmatpush.msra.mxu0 %v743
        %926 = vmatpush.msra.mxu0 %v742
        %927 = vmatpush.msra.mxu0 %v741
        %928 = vmatpush.msra.mxu0 %v740
        %929 = vmatpush.msra.mxu0 %v739
        %930 = vmatmul.f32.gmra.mxu0 %v910
        %v931 = vpop.f32.mrf.mxu0
        %v932 = vadd.f32 0.0, %v931
        %933 = vdwg.mxu0
        %934 = vmatpush.msra.mxu0 %v770
        %935 = vmatpush.msra.mxu0 %v769
        %936 = vmatpush.msra.mxu0 %v768
        %937 = vmatpush.msra.mxu0 %v767
        %938 = vmatpush.msra.mxu0 %v766
        %939 = vmatpush.msra.mxu0 %v765
        %940 = vmatpush.msra.mxu0 %v764
        %941 = vmatpush.msra.mxu0 %v763
        %942 = vmatpush.msra.mxu0 %v762
        %943 = vmatpush.msra.mxu0 %v761
        %944 = vmatpush.msra.mxu0 %v760
        %945 = vmatpush.msra.mxu0 %v759
        %946 = vmatpush.msra.mxu0 %v758
        %947 = vmatpush.msra.mxu0 %v757
        %948 = vmatpush.msra.mxu0 %v756
        %949 = vmatpush.msra.mxu0 %v755
        %950 = vmatmul.f32.gmra.mxu0 %v911
        %v951 = vpop.f32.mrf.mxu0
        %v952 = vadd.f32 %v932, %v951
        %953 = vdwg.mxu0
        %v954 = vmul.f32 %v952, 0.015625
        %v955 = vadd.f32 %v954, 1e-05
        %v956 = vrsqrt.pop %v955
        %v957 = vmul.f32 %v956, %v955
        %v958 = vmul.f32 %v957, %v956
        %v959 = vmul.f32 0.5, %v958
        %v960 = vsub.f32 1.5, %v959
        %v961 = vmul.f32 %v956, %v960
        %v962 = vmul.f32 %v955, %v961
        %vm963 = vcmp.eq.f32.partialorder %v955, inf
        %v964 = vsel %vm963, %v955, %v962
        %vm965 = vcmp.eq.f32.partialorder %v955, 0.0
        %v966 = vand.u32 %v955, 2147483648
        %v967 = vsel %vm965, %v966, %v964
        %v968 = vrsqrt.pop %v955
        %v969 = vmul.f32 %v968, %v955
        %v970 = vmul.f32 %v969, %v968
        %v971 = vmul.f32 0.5, %v970
        %v972 = vsub.f32 1.5, %v971
        %v973 = vmul.f32 %v968, %v972
        %vm974 = vweird.f32 %v955
        %vm975 = vweird.f32 %v968
        %vm976 = vmor %vm974, %vm975
        %v977 = vsel %vm976, %v968, %v973
        %v979 = vsel %vm849, %v977, 0
        %981 = vmatpush.msra.mxu0 0.0
        %982 = vmatpush.msra.mxu0 0.0
        %983 = vmatpush.msra.mxu0 0.0
        %984 = vmatpush.msra.mxu0 0.0
        %985 = vmatpush.msra.mxu0 0.0
        %986 = vmatpush.msra.mxu0 0.0
        %987 = vmatpush.msra.mxu0 0.0
        %988 = vmatpush.msra.mxu0 0.0
        %989 = vmatpush.msra.mxu0 0.0
        %990 = vmatpush.msra.mxu0 0.0
        %991 = vmatpush.msra.mxu0 0.0
        %992 = vmatpush.msra.mxu0 0.0
        %993 = vmatpush.msra.mxu0 0.0
        %994 = vmatpush.msra.mxu0 0.0
        %995 = vmatpush.msra.mxu0 0.0
        %996 = vmatpush.msra.mxu0 %v855
        %997 = vmatmul.f32.gmra.mxu0 %v979
        %v998 = vpop.f32.mrf.mxu0
        %v999 = vadd.f32 0.0, %v998
        %1000 = vdwg.mxu0
        %1001 = vmatpush.msra.mxu0 0.0
        %1002 = vmatpush.msra.mxu0 0.0
        %1003 = vmatpush.msra.mxu0 0.0
        %1004 = vmatpush.msra.mxu0 0.0
        %1005 = vmatpush.msra.mxu0 0.0
        %1006 = vmatpush.msra.mxu0 0.0
        %1007 = vmatpush.msra.mxu0 0.0
        %1008 = vmatpush.msra.mxu0 0.0
        %1009 = vmatpush.msra.mxu0 0.0
        %1010 = vmatpush.msra.mxu0 0.0
        %1011 = vmatpush.msra.mxu0 0.0
        %1012 = vmatpush.msra.mxu0 0.0
        %1013 = vmatpush.msra.mxu0 0.0
        %1014 = vmatpush.msra.mxu0 0.0
        %1015 = vmatpush.msra.mxu0 0.0
        %1016 = vmatpush.msra.mxu0 %v858
        %1017 = vmatmul.f32.gmra.mxu0 %v979
        %v1018 = vpop.f32.mrf.mxu0
        %v1019 = vadd.f32 0.0, %v1018
        %1020 = vdwg.mxu0
        %v1023 = vrot.slane %v1019, 7
        %v1024 = vsel %vm903, %v999, %v1023
        %v1026 = vmul.f32 %v906, %v1024
        %v1027 = vld [vmem:[#allocation5] sm:$0x3]
        %v1028 = vld [vmem:[#allocation7] sm:$0x3]
        %v1029 = vmul.f32 %v1026, %v1027
        %v1030 = vadd.f32 %v1029, %v1028
        %v1031 = vlaneseq
        %vm1032 = vcmp.ge.s32.totalorder %v1031, 0
        %vm1033 = vcmp.lt.s32.totalorder %v1031, 256
        %vm1034 = vmand %vm1032, %vm1033
        %1035 = vst.msk [vmem:[%s247] sm:$0x3] %vm1034, %v1030
        %v1037 = vrot.slane %v967, 7
        %v1039 = vsel %vm903, %v848, %v1037
        %vm1040 = vcmask 25600
        %1041 = vst.msk [vmem:[%s254] sm:$0x3] %vm1040, %v1039
        %s1042 = sand.u32 %s102, 1
        %s1043 = scalar_lea.sflag [#allocation4], %s1042
        %s1044 = sand.u32 %s102, 1
        %s1045 = smul.addr %s1044, 2
        %s1046 = scalar_lea.vmem [#allocation8], %s1045
        %s1047 = sand.u32 %s128, 1
        %s1048 = scalar_lea.sflag [#allocation10], %s1047
        %s1049 = sand.u32 %s128, 1
        %s1050 = smul.addr %s1049, 2
        %s1051 = scalar_lea.vmem [#allocation9], %s1050
        // Predicated region
        $region45: #{tpu_custom_call.1} parent=31 // pred_check
          %p1052 = pneg %p112
        $region46: #{tpu_custom_call.1} parent=31 // pred_check_branch
          %1054 = sbr.rel (%p1052) target = $region48
        $region47: #{tpu_custom_call.1} parent=31 // pred_region
          %1056 = vsyncadd %s1043, 0
          %s1057 = smul.addr %s26, 2
          %s1058 = scalar_lea.hbm %s3, %s1057
          %s1060 = sshll.u32 %s1046, 4
          %s1061 = int_to_ptr.vmem [resolvable:$true] %s1060
          %s1062 = sshll.u32 %s1058, 4
          %s1063 = int_to_ptr.hbm [resolvable:$true] %s1062
          %1065 = dma.vmem_to_hbm [thread:$0]  %s1061, 32, %s1063, %s1043
        $region48: #{tpu_custom_call.1} parent=31 // pred_fallthru
          _
        // Predicated region
        $region49: #{tpu_custom_call.1} parent=31 // pred_check
          %p1066 = pneg %p138
        $region50: #{tpu_custom_call.1} parent=31 // pred_check_branch
          %1068 = sbr.rel (%p1066) target = $region52
        $region51: #{tpu_custom_call.1} parent=31 // pred_region
          %1070 = vsyncadd %s1048, 0
          %s1071 = smul.addr %s26, 2
          %s1072 = scalar_lea.hbm %s4, %s1071
          %s1074 = sshll.u32 %s1051, 4
          %s1075 = int_to_ptr.vmem [resolvable:$true] %s1074
          %s1076 = sshll.u32 %s1072, 4
          %s1077 = int_to_ptr.hbm [resolvable:$true] %s1076
          %1079 = dma.vmem_to_hbm [thread:$0]  %s1075, 32, %s1077, %s1048
        $region52: #{tpu_custom_call.1} parent=31 // pred_fallthru
          _
      $region32: #{tpu_custom_call.1} parent=5 // pred_fallthru
        _
      %p1080 = scmp.le.s32.totalorder 2, %s21
      // Predicated region
      $region53: #{tpu_custom_call.1} parent=5 // pred_check
        %p1081 = pneg %p1080
      $region54: #{tpu_custom_call.1} parent=5 // pred_check_branch
        %1083 = sbr.rel (%p1081) target = $region56
      $region55: #{tpu_custom_call.1} parent=5 // pred_region
        %s1084 = ssub.s32 %s21, 2
        // Predicated region
        $region57: #{tpu_custom_call.1} parent=55 // pred_check
          %p1085 = pneg %p118
        $region58: #{tpu_custom_call.1} parent=55 // pred_check_branch
          %1087 = sbr.rel (%p1085) target = $region60
        $region59: #{tpu_custom_call.1} parent=55 // pred_region
          %s1088 = sand.u32 %s103, 1
          %s1089 = scalar_lea.sflag [#allocation4], %s1088
          %s1090 = sand.u32 %s103, 1
          %s1091 = smul.addr %s1090, 2
          %s1092 = scalar_lea.vmem [#allocation8], %s1091
          %1094 = dma.done %s1089, 32
        $region60: #{tpu_custom_call.1} parent=55 // pred_fallthru
          _
        // Predicated region
        $region61: #{tpu_custom_call.1} parent=55 // pred_check
          %p1095 = pneg %p144
        $region62: #{tpu_custom_call.1} parent=55 // pred_check_branch
          %1097 = sbr.rel (%p1095) target = $region64
        $region63: #{tpu_custom_call.1} parent=55 // pred_region
          %s1098 = sand.u32 %s129, 1
          %s1099 = scalar_lea.sflag [#allocation10], %s1098
          %s1100 = sand.u32 %s129, 1
          %s1101 = smul.addr %s1100, 2
          %s1102 = scalar_lea.vmem [#allocation9], %s1101
          %1104 = dma.done %s1099, 32
        $region64: #{tpu_custom_call.1} parent=55 // pred_fallthru
          _
      $region56: #{tpu_custom_call.1} parent=5 // pred_fallthru
        _
    $region6: #{tpu_custom_call.1} parent=1 // loop_footer
      %s25 = sadd.s32 1, %s21
    $region7: #{tpu_custom_call.1} parent=1 // loop_footer_branch
      %20 = sbr.rel target = $region3
    $region8: #{tpu_custom_call.1} parent=1 // loop_exit
      _
    %1105 = vsyncpa [#allocation3], 1
    %s1106 = scalar_lea.sflag [#allocation3], 1
    %1107 = vsyncpa %s1106, 1
    %1108 = vsyncpa [#allocation6], 1
    %1109 = vsyncpa [#allocation4], 1
    %s1110 = scalar_lea.sflag [#allocation4], 1
    %1111 = vsyncpa %s1110, 1
    %1112 = vsyncpa [#allocation10], 1
    %s1113 = scalar_lea.sflag [#allocation10], 1
    %1114 = vsyncpa %s1113, 1

</llo_original>
